<compile_context>
chip_gen: v6e
topology: v6e:2x2x1
jax: 0.10.0
libtpu: 0.0.40
codegen_flags: <defaults>
</compile_context>

<pallas_src>
import functools

import jax
import jax.numpy as jnp
from jax.experimental import pallas as pl
from jax.experimental.pallas import tpu as pltpu

ALPHA = 1.0
GAMMA = 2.0


def _focal_loss_kernel(x_ref, t_ref, out_ref, acc_ref, *,
                       n_total, n_classes, rows_per_step, steps_per_partial,
                       alpha, gamma, low_precision_exp):
    """One (tile_m, C) tile: row-wise CE -> focal weight -> per-row accumulate.

    x_ref  : (TM, C)    logits tile (native dtype; upcast to f32 in-kernel)
    t_ref  : (TM, 1)    int32 target class indices
    out_ref: (1, 1, 1)  f32 per-partial sum (written on the last inner step only)
    acc_ref: (TM, 1)    f32 per-row running accumulator (VMEM scratch)
    """
    p = pl.program_id(0)
    j = pl.program_id(1)

    @pl.when(j == 0)
    def _():
        acc_ref[...] = jnp.zeros_like(acc_ref)

    x = x_ref[...].astype(jnp.float32)            # (TM, C)
    t = t_ref[...]                                # (TM, 1) int32

    # Defense-in-depth for the physically lane-padded VMEM tile: the block's
    # last dim already equals the true (unpadded) C, so Mosaic masks pad lanes
    # in the reductions below; this select additionally pins any lane >= C to a
    # huge negative so it can never enter max / logsumexp.
    if n_classes % 128 != 0:
        lane = jax.lax.broadcasted_iota(jnp.int32, x.shape, 1)
        x = jnp.where(lane < n_classes, x, jnp.float32(-3.0e38))

    # Numerically-stable log-sum-exp along the class (lane) axis.
    m = jnp.max(x, axis=-1, keepdims=True)
    if low_precision_exp and x_ref.dtype == jnp.bfloat16:
        # bf16 EUP path (v6e/v7x only): halves exp-slot pressure when the EUP is
        # the binding slot for bf16 inputs; the sum stays in f32.
        e = jnp.exp((x - m).astype(jnp.bfloat16)).astype(jnp.float32)
    else:
        e = jnp.exp(x - m)
    lse = jnp.log(jnp.sum(e, axis=-1, keepdims=True)) + m

    # Gather the logit at the target class via a one-hot (iota == target) mask.
    cls = jax.lax.broadcasted_iota(jnp.int32, x.shape, 1)
    tgt_logit = jnp.sum(jnp.where(cls == t, x, 0.0), axis=-1, keepdims=True)

    # Clamp: ce can come out a few ULP negative when the target is the argmax,
    # which would make (1 - pt) negative (NaN under a float-exponent pow).
    ce = jnp.maximum(lse - tgt_logit, 0.0)        # (TM, 1)
    pt = jnp.exp(-ce)
    base = 1.0 - pt
    if gamma == 2.0:
        w = jnp.square(base)                      # plain VPU multiply
    elif float(gamma).is_integer():
        w = jax.lax.integer_pow(base, int(gamma))
    else:
        w = jnp.power(jnp.maximum(base, 0.0), gamma)
    focal = alpha * w * ce                        # (TM, 1)

    # Zero out rows past the true N (ragged boundary tile / clamped OOB block).
    # jnp.where is a select, so garbage/NaN in masked rows cannot propagate.
    row0 = (p * steps_per_partial + j) * rows_per_step
    row_id = row0 + jax.lax.broadcasted_iota(jnp.int32, focal.shape, 0)
    focal = jnp.where(row_id < n_total, focal, 0.0)

    # Per-row accumulate; cross-sublane reduction only once, at the end.
    acc_ref[...] += focal

    @pl.when(j == steps_per_partial - 1)
    def _():
        out_ref[...] = jnp.sum(acc_ref[...]).reshape(1, 1, 1)


def _vmem_capacity_bytes():
    """Per-core VMEM capacity (128 MiB on v5e/v6e, 64 MiB per TC on v7x)."""
    try:
        cap = getattr(pltpu.get_tpu_info(), "vmem_capacity_bytes", None)
        if cap:
            return int(cap)
    except Exception:
        pass
    return 128 * 1024 * 1024


def _default_num_partials():
    """Partial-sum count = TensorCores per chip (1 on v5e/v6e, 2 on v7x)."""
    # TODO(synk): on v7x, verify with xprof that the "parallel" leading axis
    # really lands on both TensorCores; switch to pltpu.CORE_PARALLEL if not.
    try:
        kind = jax.devices()[0].device_kind.lower()
    except Exception:
        return 1
    return 2 if "v7" in kind else 1


def _choose_tile_m(n, c, num_partials, vmem_cap):
    """Largest multiple-of-8 row tile whose f32 working set (covers the native
    input tile, its in-kernel f32 upcast and exp temporaries, double-buffered)
    stays around vmem_cap/8 per buffer — ~16 MiB on 128-MiB v5e/v6e and ~8 MiB
    on 64-MiB-per-TC v7x — keeping per-grid-step overhead at a few percent."""
    c_vmem = ((c + 127) // 128) * 128             # physical lane-padded row width
    budget = max(2 * 1024 * 1024, min(24 * 1024 * 1024, vmem_cap // 8))
    rows_cap = max(8, (budget // (c_vmem * 4)) // 8 * 8)
    per_partial = max(8, (pl.cdiv(n, num_partials) + 7) // 8 * 8)
    return min(rows_cap, per_partial)


def focal_loss(inputs, targets, *, alpha=ALPHA, gamma=GAMMA,
               num_partials=None, tile_m=None, low_precision_exp=False):
    """inputs: (N, C) float logits (streamed in native dtype, no padding copies);
    targets: (N,) int class ids.  Returns scalar float32 mean focal loss."""
    n, c = inputs.shape
    assert jnp.issubdtype(inputs.dtype, jnp.floating), "logits must be float"

    if num_partials is None:
        num_partials = _default_num_partials()
    num_partials = max(1, min(int(num_partials), pl.cdiv(n, 8)))

    vmem_cap = _vmem_capacity_bytes()
    if tile_m is None:
        tile_m = _choose_tile_m(n, c, num_partials, vmem_cap)

    nb = pl.cdiv(n, tile_m)                       # row blocks that cover N
    steps = pl.cdiv(nb, num_partials)             # inner (reduction) steps / partial

    # If num_partials * steps > nb, the trailing blocks of the last partial would
    # start entirely past the array; clamp them onto the last valid block (their
    # rows are masked in-kernel, so they contribute exactly zero).
    if num_partials * steps > nb:
        last = nb - 1
        row_block = lambda p, j: (jnp.minimum(p * steps + j, last), 0)
    else:
        row_block = lambda p, j: (p * steps + j, 0)

    t2 = targets.astype(jnp.int32).reshape(n, 1)

    kernel = functools.partial(
        _focal_loss_kernel, n_total=n, n_classes=c, rows_per_step=tile_m,
        steps_per_partial=steps, alpha=float(alpha), gamma=float(gamma),
        low_precision_exp=bool(low_precision_exp))

    partials = pl.pallas_call(
        kernel,
        out_shape=jax.ShapeDtypeStruct((num_partials, 1, 1), jnp.float32),
        grid_spec=pltpu.PrefetchScalarGridSpec(
            num_scalar_prefetch=0,
            grid=(num_partials, steps),
            in_specs=[
                # Last block dim equals the full (unpadded) C -> contiguous DMA,
                # no wrapper-side class pad, no extra HBM round trip.
                pl.BlockSpec((tile_m, c), row_block),
                pl.BlockSpec((tile_m, 1), row_block),
            ],
            out_specs=pl.BlockSpec((1, 1, 1), lambda p, j: (p, 0, 0)),
            scratch_shapes=[pltpu.VMEM((tile_m, 1), jnp.float32)],
        ),
        compiler_params=pltpu.CompilerParams(
            # Leading axis is megacore-parallel (2 TCs on v7x split the loss);
            # inner reduction axis carries the per-partial accumulator.
            dimension_semantics=("parallel", "arbitrary"),
            # 3/4 of per-core VMEM: 96 MiB on v5e/v6e (128 MiB physical),
            # 48 MiB on v7x (64 MiB per TC).
            vmem_limit_bytes=int(vmem_cap * 3 // 4),
        ),
    )(inputs, t2)

    # Tiny final reduction (num_partials scalars) done in plain JAX.
    return jnp.sum(partials) / jnp.float32(n)


def _focal_loss_ref(inputs, targets, alpha=ALPHA, gamma=GAMMA):
    """Pure-JAX reference mirroring F.cross_entropy(reduction='none') + focal."""
    logz = jax.nn.logsumexp(inputs.astype(jnp.float32), axis=-1)
    tgt = jnp.take_along_axis(inputs.astype(jnp.float32),
                              targets[:, None].astype(jnp.int32), axis=-1)[:, 0]
    ce = logz - tgt
    pt = jnp.exp(-ce)
    return jnp.mean(alpha * (1.0 - pt) ** gamma * ce)


if __name__ == "__main__":
    key = jax.random.PRNGKey(0)
    k1, k2 = jax.random.split(key)

    # Small synthetic shapes: 20 samples, 32 classes (C deliberately not a
    # multiple of 128 to exercise the unpadded class axis).
    N_FULL, C = 20, 32
    inputs_full = jax.random.normal(k1, (N_FULL, C), dtype=jnp.float32)
    targets_full = jax.random.randint(k2, (N_FULL,), 0, C, dtype=jnp.int32)

    # 1) f32, evenly-divisible N, default (chip-derived) num_partials.
    inputs, targets = inputs_full[:16], targets_full[:16]
    out = jax.block_until_ready(focal_loss(inputs, targets))
    ref = _focal_loss_ref(inputs, targets)
    assert jnp.allclose(out, ref, atol=1e-5, rtol=1e-5), (out, ref)

    # 2) bf16 logits: kernel streams native bf16 from HBM, upcasts in-kernel.
    inputs_bf16 = inputs.astype(jnp.bfloat16)
    out_bf16 = jax.block_until_ready(focal_loss(inputs_bf16, targets))
    ref_bf16 = _focal_loss_ref(inputs_bf16.astype(jnp.float32), targets)
    assert jnp.allclose(out_bf16, ref_bf16, atol=1e-4, rtol=1e-4), (out_bf16, ref_bf16)

    # 3) Ragged N (no wrapper row pad) + forced 2-partial split with a clamped
    #    trailing block: N=20, tile_m=8 -> 3 row blocks over a (2, 2) grid.
    out_r = jax.block_until_ready(
        focal_loss(inputs_full, targets_full, tile_m=8, num_partials=2))
    ref_r = _focal_loss_ref(inputs_full, targets_full)
    assert jnp.allclose(out_r, ref_r, atol=1e-5, rtol=1e-5), (out_r, ref_r)

    print("KERNEL_OK")
</pallas_src>

<mosaic_0001>
module attributes {stable_mosaic.version = 11 : i64} {
  func.func @_focal_loss_kernel(%arg0: i32, %arg1: i32, %arg2: memref<16x32xf32, #tpu.memory_space<vmem>>, %arg3: memref<16x1xi32, #tpu.memory_space<vmem>>, %arg4: memref<1x1x1xf32, #tpu.memory_space<vmem>>, %arg5: memref<16x1xf32, #tpu.memory_space<vmem>>) attributes {dimension_semantics = [#tpu.dimension_semantics<parallel>, #tpu.dimension_semantics<arbitrary>], iteration_bounds = array<i64: 1, 1>, scalar_prefetch = 0 : i64, scratch_operands = 1 : i64, tpu.core_type = #tpu.core_type<tc>, window_params = [{transform_indices = @transform_0, window_bounds = array<i64: 16, 32>}, {transform_indices = @transform_1, window_bounds = array<i64: 16, 1>}, {transform_indices = @transform_2, window_bounds = array<i64: 1, 1, 1>}]} {
    %c0_i32 = arith.constant 0 : i32
    %0 = arith.cmpi eq, %arg1, %c0_i32 : i32
    %1 = arith.extui %0 : i1 to i32
    %c0_i32_0 = arith.constant 0 : i32
    %2 = arith.cmpi ne, %1, %c0_i32_0 : i32
    scf.if %2 {
      %cst_20 = arith.constant 0.000000e+00 : f32
      %54 = vector.broadcast %cst_20 : f32 to vector<16x1xf32>
      %c0_21 = arith.constant 0 : index
      %c0_22 = arith.constant 0 : index
      %55 = vector.load %arg5[%c0_21, %c0_22] : memref<16x1xf32, #tpu.memory_space<vmem>>, vector<16x1xf32>
      tpu.vector_store %arg5[%c0_21, %c0_22], %54 {strides = array<i32>} : memref<16x1xf32, #tpu.memory_space<vmem>>, vector<16x1xf32>,
    } else {
    }
    %c0 = arith.constant 0 : index
    %c0_1 = arith.constant 0 : index
    %3 = vector.load %arg2[%c0, %c0_1] : memref<16x32xf32, #tpu.memory_space<vmem>>, vector<16x32xf32>
    %c0_2 = arith.constant 0 : index
    %c0_3 = arith.constant 0 : index
    %4 = vector.load %arg3[%c0_2, %c0_3] : memref<16x1xi32, #tpu.memory_space<vmem>>, vector<16x1xi32>
    %5 = tpu.iota {dimensions = array<i32: 1>} : vector<16x32xi32>
    %c32_i32 = arith.constant 32 : i32
    %6 = vector.broadcast %c32_i32 : i32 to vector<16x32xi32>
    %7 = arith.cmpi slt, %5, %6 : vector<16x32xi32>
    %cst = arith.constant -3.000000e+38 : f32
    %8 = vector.broadcast %cst : f32 to vector<16x32xf32>
    %9 = arith.select %7, %3, %8 : vector<16x32xi1>, vector<16x32xf32>
    %cst_4 = arith.constant dense<0xFF800000> : vector<16xf32>
    %10 = vector.multi_reduction <maximumf>, %9, %cst_4 [1] : vector<16x32xf32> to vector<16xf32>
    %11 = vector.shape_cast %10 : vector<16xf32> to vector<16x1xf32>
    %12 = vector.broadcast %11 : vector<16x1xf32> to vector<16x32xf32>
    %13 = arith.subf %9, %12 : vector<16x32xf32>
    %14 = math.exp %13 : vector<16x32xf32>
    %cst_5 = arith.constant dense<0.000000e+00> : vector<16xf32>
    %15 = vector.multi_reduction <add>, %14, %cst_5 [1] : vector<16x32xf32> to vector<16xf32>
    %16 = vector.shape_cast %15 : vector<16xf32> to vector<16x1xf32>
    %17 = math.log %16 : vector<16x1xf32>
    %18 = arith.addf %17, %11 : vector<16x1xf32>
    %19 = tpu.iota {dimensions = array<i32: 1>} : vector<16x32xi32>
    %20 = vector.broadcast %4 : vector<16x1xi32> to vector<16x32xi32>
    %21 = arith.cmpi eq, %19, %20 : vector<16x32xi32>
    %cst_6 = arith.constant 0.000000e+00 : f32
    %22 = vector.broadcast %cst_6 : f32 to vector<16x32xf32>
    %23 = arith.select %21, %9, %22 : vector<16x32xi1>, vector<16x32xf32>
    %cst_7 = arith.constant dense<0.000000e+00> : vector<16xf32>
    %24 = vector.multi_reduction <add>, %23, %cst_7 [1] : vector<16x32xf32> to vector<16xf32>
    %25 = vector.shape_cast %24 : vector<16xf32> to vector<16x1xf32>
    %26 = arith.subf %18, %25 : vector<16x1xf32>
    %cst_8 = arith.constant 0.000000e+00 : f32
    %27 = vector.broadcast %cst_8 : f32 to vector<16x1xf32>
    %28 = arith.maximumf %26, %27 : vector<16x1xf32>
    %cst_9 = arith.constant 0.000000e+00 : f32
    %29 = vector.broadcast %cst_9 : f32 to vector<16x1xf32>
    %30 = arith.subf %29, %28 : vector<16x1xf32>
    %31 = math.exp %30 : vector<16x1xf32>
    %cst_10 = arith.constant 1.000000e+00 : f32
    %32 = vector.broadcast %cst_10 : f32 to vector<16x1xf32>
    %33 = arith.subf %32, %31 : vector<16x1xf32>
    %34 = arith.mulf %33, %33 : vector<16x1xf32>
    %cst_11 = arith.constant 1.000000e+00 : f32
    %35 = vector.broadcast %cst_11 : f32 to vector<16x1xf32>
    %36 = arith.mulf %35, %34 : vector<16x1xf32>
    %37 = arith.mulf %36, %28 : vector<16x1xf32>
    %c1_i32 = arith.constant 1 : i32
    %38 = arith.muli %arg0, %c1_i32 : i32
    %39 = arith.addi %38, %arg1 : i32
    %c16_i32 = arith.constant 16 : i32
    %40 = arith.muli %39, %c16_i32 : i32
    %41 = tpu.iota {dimensions = array<i32: 0>} : vector<16x1xi32>
    %42 = vector.broadcast %40 : i32 to vector<16x1xi32>
    %43 = arith.addi %42, %41 : vector<16x1xi32>
    %c16_i32_12 = arith.constant 16 : i32
    %44 = vector.broadcast %c16_i32_12 : i32 to vector<16x1xi32>
    %45 = arith.cmpi slt, %43, %44 : vector<16x1xi32>
    %cst_13 = arith.constant 0.000000e+00 : f32
    %46 = vector.broadcast %cst_13 : f32 to vector<16x1xf32>
    %47 = arith.select %45, %37, %46 : vector<16x1xi1>, vector<16x1xf32>
    %c0_14 = arith.constant 0 : index
    %c0_15 = arith.constant 0 : index
    %48 = vector.load %arg5[%c0_14, %c0_15] : memref<16x1xf32, #tpu.memory_space<vmem>>, vector<16x1xf32>
    %49 = arith.addf %48, %47 : vector<16x1xf32>
    %c0_16 = arith.constant 0 : index
    %c0_17 = arith.constant 0 : index
    %50 = vector.load %arg5[%c0_16, %c0_17] : memref<16x1xf32, #tpu.memory_space<vmem>>, vector<16x1xf32>
    tpu.vector_store %arg5[%c0_16, %c0_17], %49 {strides = array<i32>} : memref<16x1xf32, #tpu.memory_space<vmem>>, vector<16x1xf32>,
    %c0_i32_18 = arith.constant 0 : i32
    %51 = arith.cmpi eq, %arg1, %c0_i32_18 : i32
    %52 = arith.extui %51 : i1 to i32
    %c0_i32_19 = arith.constant 0 : i32
    %53 = arith.cmpi ne, %52, %c0_i32_19 : i32
    scf.if %53 {
      %c0_20 = arith.constant 0 : index
      %c0_21 = arith.constant 0 : index
      %54 = vector.load %arg5[%c0_20, %c0_21] : memref<16x1xf32, #tpu.memory_space<vmem>>, vector<16x1xf32>
      %55 = vector.shape_cast %54 : vector<16x1xf32> to vector<1x16x1xf32>
      %cst_22 = arith.constant dense<0.000000e+00> : vector<1xf32>
      %56 = vector.multi_reduction <add>, %55, %cst_22 [1, 2] : vector<1x16x1xf32> to vector<1xf32>
      %57 = vector.shape_cast %56 : vector<1xf32> to vector<1x1x1xf32>
      %58 = vector.extract %57[0, 0, 0] : f32 from vector<1x1x1xf32>
      %59 = vector.broadcast %58 : f32 to vector<1x1x1xf32>
      %c0_23 = arith.constant 0 : index
      %c0_24 = arith.constant 0 : index
      %c0_25 = arith.constant 0 : index
      %60 = vector.load %arg4[%c0_23, %c0_24, %c0_25] : memref<1x1x1xf32, #tpu.memory_space<vmem>>, vector<1x1x1xf32>
      tpu.vector_store %arg4[%c0_23, %c0_24, %c0_25], %59 {strides = array<i32>} : memref<1x1x1xf32, #tpu.memory_space<vmem>>, vector<1x1x1xf32>,
    } else {
    }
    return
  }
  func.func @transform_0(%arg0: i32, %arg1: i32) -> (i32, i32) {
    %c1_i32 = arith.constant 1 : i32
    %0 = arith.muli %arg0, %c1_i32 : i32
    %1 = arith.addi %0, %arg1 : i32
    %c0_i32 = arith.constant 0 : i32
    %c0_i32_0 = arith.constant 0 : i32
    return %1, %c0_i32 : i32, i32
  }
  func.func @transform_1(%arg0: i32, %arg1: i32) -> (i32, i32) {
    %c1_i32 = arith.constant 1 : i32
    %0 = arith.muli %arg0, %c1_i32 : i32
    %1 = arith.addi %0, %arg1 : i32
    %c0_i32 = arith.constant 0 : i32
    %c0_i32_0 = arith.constant 0 : i32
    return %1, %c0_i32 : i32, i32
  }
  func.func @transform_2(%arg0: i32, %arg1: i32) -> (i32, i32, i32) {
    %c0_i32 = arith.constant 0 : i32
    %c0_i32_0 = arith.constant 0 : i32
    %c0_i32_1 = arith.constant 0 : i32
    return %arg0, %c0_i32, %c0_i32_0 : i32, i32, i32
  }
}

</mosaic_0001>

<llo_original>
// kernel: tpu_custom_call.1
$region0: #{tpu_custom_call.1}
  #allocation0 [shape = 'u32[]', space=smem, size = 0x4, offset = 0x4, fixed_abs, tag = 'smem constant byte address 0x4 - core index']
  #allocation1 [shape = 'u32[144,128]{1,0:T(1,128)}', space=vmem, size = 0x12000, scoped, tag = 'internal scratch']
  #allocation2 [shape = 'f32[16,1]{1,0:T(8,128)}', space=vmem, size = 0x2000, scoped, tag = 'scratch operand']
  %s0 = inlined_call_operand.vmem [shape: f32[16,32], index: 0, kind: input, shape index: {}]
  %s1 = inlined_call_operand.vmem [shape: s32[16,1], index: 1, kind: input, shape index: {}]
  %s2 = inlined_call_operand.hbm [shape: f32[1,1,1], index: 2, kind: output, shape index: {}]
  %s3 = sld [smem:[#allocation0]]
  $region26: #{tpu_custom_call.1} parent=0
    _
  %s5 = ssub.s32 1, %s3
  %s6 = scalar_select 0, %s5, %s3
  $region1: #{tpu_custom_call.1} parent=0
    #allocation3 [shape = 'u8[512]{0}', space=vmem, size = 0x400, scoped, tag = 'output window, operand 0, single buffered']
    #allocation4 [shape = 's32[1]{0}', space=sflag, size = 0x4, scoped, tag = 'scoped memory for tpu_custom_call.1']
    %7 = vsyncpa [#allocation4], 0
    // Predicated region
    $region2: #{tpu_custom_call.1} parent=1 // pred_check
      _
    $region3: #{tpu_custom_call.1} parent=1 // pred_check_branch
      %9 = sbr.rel (0) target = $region5
    $region4: #{tpu_custom_call.1} parent=1 // pred_region
      %s10 = sadd.s32 0, 0
      %s11 = smul.u32 2, %s10
      %p12 = scmp.lt.s32.totalorder %s11, 1
      %s13 = scalar_select %p12, %s11, 1
      %s14 = smul.addr %s13, 8
      %s15 = scalar_lea.vmem %s0, %s14
      %s16 = sadd.s32 0, 0
      %s17 = smul.u32 2, %s16
    $region5: #{tpu_custom_call.1} parent=1 // pred_fallthru
      _
    // Predicated region
    $region6: #{tpu_custom_call.1} parent=1 // pred_check
      _
    $region7: #{tpu_custom_call.1} parent=1 // pred_check_branch
      %19 = sbr.rel (0) target = $region9
    $region8: #{tpu_custom_call.1} parent=1 // pred_region
      %s20 = sadd.s32 0, 0
      %s21 = smul.u32 2, %s20
      %p22 = scmp.lt.s32.totalorder %s21, 1
      %s23 = scalar_select %p22, %s21, 1
      %s24 = smul.addr %s23, 8
      %s25 = scalar_lea.vmem %s1, %s24
      %s26 = sadd.s32 0, 0
      %s27 = smul.u32 2, %s26
    $region9: #{tpu_custom_call.1} parent=1 // pred_fallthru
      _
    %s28 = sadd.s32 0, 0
    %s29 = smul.u32 2, %s28
    %p30 = scmp.lt.s32.totalorder %s29, 1
    %s31 = scalar_select %p30, %s29, 1
    %s32 = smul.addr %s31, 8
    %s33 = scalar_lea.vmem %s0, %s32
    %s34 = sadd.s32 0, 0
    %s35 = smul.u32 2, %s34
    %p36 = scmp.lt.s32.totalorder %s35, 1
    %s37 = scalar_select %p36, %s35, 1
    %s38 = smul.addr %s37, 8
    %s39 = scalar_lea.vmem %s1, %s38
    %s40 = sadd.s32 0, 0
    %s41 = smul.u32 2, %s40
    %p42 = scmp.lt.s32.totalorder %s41, 1
    %s43 = scalar_select %p42, %s41, 1
    %s44 = smul.addr %s43, 8
    %s45 = scalar_lea.vmem %s0, %s44
    %s46 = sadd.s32 0, 0
    %s47 = smul.u32 2, %s46
    %s48 = sadd.s32 0, 0
    %s49 = smul.u32 2, %s48
    %p50 = scmp.lt.s32.totalorder %s49, 1
    %s51 = scalar_select %p50, %s49, 1
    %s52 = smul.addr %s51, 8
    %s53 = scalar_lea.vmem %s1, %s52
    %s54 = sadd.s32 0, 0
    %s55 = smul.u32 2, %s54
    %p56 = scmp.eq.s32.totalorder 0, 0
    // Predicated region
    $region10: #{tpu_custom_call.1} parent=1 // pred_check
      %p57 = pneg %p56
    $region11: #{tpu_custom_call.1} parent=1 // pred_check_branch
      %59 = sbr.rel (%p57) target = $region13
    $region12: #{tpu_custom_call.1} parent=1 // pred_region
      %vm60 = vcmask 7168
      %61 = vst.msk [vmem:[#allocation2] sm:$0xff] %vm60, 0.0
      %62 = vst.msk [vmem:[#allocation2 + $0x8] sm:$0xff] %vm60, 0.0
    $region13: #{tpu_custom_call.1} parent=1 // pred_fallthru
      _
    %v63 = vld [vmem:[%s45] sm:$0xff]
    %v64 = vld [vmem:[%s45 + $0x8] sm:$0xff]
    %v65 = vld [vmem:[%s53] sm:$0xff]
    %v66 = vld [vmem:[%s53 + $0x8] sm:$0xff]
    %v67 = vlaneseq
    %v68 = vand.u32 %v67, 127
    %vm69 = vcmp.lt.s32.totalorder %v68, 32
    %v70 = vsel %vm69, %v63, -3e+38
    %v71 = vsel %vm69, %v64, -3e+38
    %vm72 = vcmask 261120
    %v73 = vsel %vm72, %v70, -inf
    %74 = vmax.xlane.f32.xlu0 %v73
    %v75 = vpop.xlane.xlu0 %74
    %v76 = vsel %vm72, %v71, -inf
    %77 = vmax.xlane.f32.xlu0 %v76
    %v78 = vpop.xlane.xlu0 %77
    %v79 = vsub.f32 %v70, %v75
    %v80 = vsub.f32 %v71, %v78
    %v81 = vmul.f32 %v79, 1.442695
    %v82 = vpow.pop %v81
    %v83 = vmul.f32 %v80, 1.442695
    %v84 = vpow.pop %v83
    %v85 = vsel %vm72, %v82, 0.0
    %86 = vadd.xlane.f32.xlu0 %v85
    %v87 = vpop.xlane.xlu0 %86
    %v88 = vsel %vm72, %v84, 0.0
    %89 = vadd.xlane.f32.xlu0 %v88
    %v90 = vpop.xlane.xlu0 %89
    %v91 = vlog2.pop %v87
    %v92 = vmul.f32 %v91, 0.6931472
    %v93 = vlog2.pop %v90
    %v94 = vmul.f32 %v93, 0.6931472
    %v95 = vadd.f32 %v92, %v75
    %v96 = vadd.f32 %v94, %v78
    %97 = vset.pattern.permute.xlu0 0
    %98 = vperm.xlu0 %97, %v65
    %v99 = vpop.permute.xlu0 %98
    %100 = vset.pattern.permute.xlu0 0
    %101 = vperm.xlu0 %100, %v66
    %v102 = vpop.permute.xlu0 %101
    %vm103 = vcmp.eq.s32.totalorder %v68, %v99
    %vm104 = vcmp.eq.s32.totalorder %v68, %v102
    %v105 = vsel %vm103, %v70, 0.0
    %v106 = vsel %vm104, %v71, 0.0
    %v107 = vsel %vm72, %v105, 0.0
    %108 = vadd.xlane.f32.xlu0 %v107
    %v109 = vpop.xlane.xlu0 %108
    %v110 = vsel %vm72, %v106, 0.0
    %111 = vadd.xlane.f32.xlu0 %v110
    %v112 = vpop.xlane.xlu0 %111
    %v113 = vsub.f32 %v95, %v109
    %v114 = vsub.f32 %v96, %v112
    %v115 = vmax.f32 %v113, 0.0
    %v116 = vmax.f32 %v114, 0.0
    %v117 = vsub.f32 0.0, %v115
    %v118 = vsub.f32 0.0, %v116
    %v119 = vmul.f32 %v117, 1.442695
    %v120 = vpow.pop %v119
    %v121 = vmul.f32 %v118, 1.442695
    %v122 = vpow.pop %v121
    %v123 = vsub.f32 1.0, %v120
    %v124 = vsub.f32 1.0, %v122
    %v125 = vmul.f32 %v123, %v123
    %v126 = vmul.f32 %v124, %v124
    %v127 = vmul.f32 %v125, %v115
    %v128 = vmul.f32 %v126, %v116
    %s129 = sadd.s32 0, 0
    %s130 = smul.u32 %s129, 16
    %v131 = vlaneseq
    %v132 = vshrl.u32 %v131, 7
    %v133 = vadd.s32 %v132, 8
    %v134 = vstv %s130
    %v135 = vadd.s32 %v134, %v132
    %v136 = vadd.s32 %v134, %v133
    %vm137 = vcmp.lt.s32.totalorder %v135, 16
    %vm138 = vcmp.lt.s32.totalorder %v136, 16
    %v139 = vsel %vm137, %v127, 0.0
    %v140 = vsel %vm138, %v128, 0.0
    %v141 = vld [vmem:[#allocation2] sm:$0xff]
    %v142 = vld [vmem:[#allocation2 + $0x8] sm:$0xff]
    %v143 = vadd.f32 %v141, %v139
    %v144 = vadd.f32 %v142, %v140
    %vm145 = vcmask 7168
    %146 = vst.msk [vmem:[#allocation2] sm:$0xff] %vm145, %v143
    %147 = vst.msk [vmem:[#allocation2 + $0x8] sm:$0xff] %vm145, %v144
    // Predicated region
    $region14: #{tpu_custom_call.1} parent=1 // pred_check
      %p148 = pneg %p56
    $region15: #{tpu_custom_call.1} parent=1 // pred_check_branch
      %150 = sbr.rel (%p148) target = $region17
    $region16: #{tpu_custom_call.1} parent=1 // pred_region
      %v151 = vld [vmem:[#allocation2] sm:$0xff]
      %v152 = vld [vmem:[#allocation2 + $0x8] sm:$0xff]
      %v153 = vsel %vm145, %v151, 0.0
      %v154 = vsel %vm145, %v152, 0.0
      %v155 = vadd.f32 %v153, %v154
      %156 = vadd.xlane.f32.xlu0 %v155
      %v157 = vpop.xlane.xlu0 %156
      %v158 = vrot.slane %v157, 4
      %v159 = vadd.f32 %v157, %v158
      %v160 = vrot.slane %v159, 2
      %v161 = vadd.f32 %v159, %v160
      %v162 = vrot.slane %v161, 1
      %v163 = vadd.f32 %v161, %v162
      %s164 = vtos %v163
      %v165 = vstv %s164
      %vm166 = vcmask 0
      %167 = vst.msk [vmem:[#allocation3] sm:$0x1] %vm166, %v165
    $region17: #{tpu_custom_call.1} parent=1 // pred_fallthru
      _
    // Predicated region
    $region18: #{tpu_custom_call.1} parent=1 // pred_check
      _
    $region19: #{tpu_custom_call.1} parent=1 // pred_check_branch
      %169 = sbr.rel (0) target = $region21
    $region20: #{tpu_custom_call.1} parent=1 // pred_region
      %s171 = ssub.s32 16, 16
      %172 = vsyncadd [#allocation4], %s171
      %s174 = sshll.u32 [#allocation3], 4
      %s175 = int_to_ptr.vmem [resolvable:$true] %s174
      %177 = dma.vmem_to_hbm [thread:$0]  %s175, 16, %s2, [#allocation4]
    $region21: #{tpu_custom_call.1} parent=1 // pred_fallthru
      _
    // Predicated region
    $region22: #{tpu_custom_call.1} parent=1 // pred_check
      _
    $region23: #{tpu_custom_call.1} parent=1 // pred_check_branch
      %179 = sbr.rel (0) target = $region25
    $region24: #{tpu_custom_call.1} parent=1 // pred_region
      %180 = dma.done [#allocation4], 16
    $region25: #{tpu_custom_call.1} parent=1 // pred_fallthru
      _
    %181 = vsyncpa [#allocation4], 1

</llo_original>
